<compile_context>
chip_gen: v5e
topology: v5e:2x2
jax: 0.10.0
libtpu: 0.0.40
codegen_flags: <defaults>
</compile_context>

<pallas_src>
import jax
import jax.numpy as jnp
from jax.experimental import pallas as pl
from jax.experimental.pallas import tpu as pltpu

HIDDEN = 5
TILE_COLS = 512       # lane dim: multiple of 128 -> unmasked, lane-dense vld/vst
MAX_TILE_ROWS = 256   # sublane cap: (256, 512) f32 = 512 KiB per buffer


def mlp_kernel(w1_ref, b1_ref, w2_ref, b2_ref, x_ref, o_ref):
    # w1_ref, b1_ref, w2_ref: SMEM (5,) f32; b2_ref: SMEM (1,) f32.
    # x_ref / o_ref: VMEM (tile_rows, TILE_COLS) f32 — each element is one
    # independent scalar input of the original (B, 1) batch.
    x = x_ref[...]
    # j = 0 term with fc2's bias folded in: no zeros-init, no trailing bias add.
    acc = jnp.maximum(x * w1_ref[0] + b1_ref[0], 0.0) * w2_ref[0] + b2_ref[0]
    # Remaining hidden units: unrolled VPU broadcast multiply-adds (no MXU/XLU).
    for j in range(1, HIDDEN):
        acc = acc + jnp.maximum(x * w1_ref[j] + b1_ref[j], 0.0) * w2_ref[j]
    o_ref[...] = acc.astype(o_ref.dtype)


def net_forward(x, w1, b1, w2, b2):
    """x: (B, 1) f32.  Params in PyTorch nn.Linear convention:
       w1 = fc1.weight (5, 1), b1 = fc1.bias (5,),
       w2 = fc2.weight (1, 5), b2 = fc2.bias (1,)."""
    B = x.shape[0]

    # Lane-dense (rows, 512) layout. rows padded to sublane (8) granularity.
    rows = pl.cdiv(B, TILE_COLS)
    rows = ((rows + 7) // 8) * 8
    if rows <= MAX_TILE_ROWS:
        tile_rows = rows                       # whole batch in one block
    else:
        tile_rows = MAX_TILE_ROWS              # multi-step pipelined grid
        rows = ((rows + tile_rows - 1) // tile_rows) * tile_rows
    Bp = rows * TILE_COLS
    grid = (rows // tile_rows,)

    # Single pad pass (no zeros+scatter); contiguous reshape is free.
    x_flat = x.reshape(B)
    if Bp != B:
        x_flat = jnp.pad(x_flat, (0, Bp - B))
    xt = x_flat.reshape(rows, TILE_COLS)

    # Tiny parameters live in SMEM; read as scalars inside the kernel.
    w1f = w1.reshape(HIDDEN).astype(jnp.float32)
    b1f = b1.reshape(HIDDEN).astype(jnp.float32)
    w2f = w2.reshape(HIDDEN).astype(jnp.float32)
    b2f = b2.reshape(1).astype(jnp.float32)
    smem_spec = pl.BlockSpec(memory_space=pltpu.MemorySpace.SMEM)

    out2d = pl.pallas_call(
        mlp_kernel,
        out_shape=jax.ShapeDtypeStruct((rows, TILE_COLS), x.dtype),
        grid=grid,
        in_specs=[
            smem_spec,  # w1
            smem_spec,  # b1
            smem_spec,  # w2
            smem_spec,  # b2
            pl.BlockSpec((tile_rows, TILE_COLS), lambda i: (i, 0)),  # x tile
        ],
        out_specs=pl.BlockSpec((tile_rows, TILE_COLS), lambda i: (i, 0)),
        compiler_params=pltpu.CompilerParams(
            dimension_semantics=("parallel",),  # shard batch grid across TCs
        ),
    )(w1f, b1f, w2f, b2f, xt)

    # Drop the zero-padded tail only if padding actually happened.
    out_flat = out2d.reshape(Bp)
    if Bp != B:
        out_flat = out_flat[:B]
    return out_flat.reshape(B, 1)


if __name__ == "__main__":
    key = jax.random.PRNGKey(0)
    k_x, k_w1, k_b1, k_w2, k_b2 = jax.random.split(key, 5)

    # Parameters in PyTorch nn.Linear convention.
    w1 = jax.random.normal(k_w1, (HIDDEN, 1), dtype=jnp.float32) * 0.5  # fc1.weight
    b1 = jax.random.normal(k_b1, (HIDDEN,), dtype=jnp.float32) * 0.1    # fc1.bias
    w2 = jax.random.normal(k_w2, (1, HIDDEN), dtype=jnp.float32) * 0.5  # fc2.weight
    b2 = jax.random.normal(k_b2, (1,), dtype=jnp.float32) * 0.1         # fc2.bias

    def ref_fn(xin):
        return jnp.maximum(xin @ w1.T + b1, 0.0) @ w2.T + b2

    # Case 1: small batch with a ragged tail -> single-block path (grid=(1,)).
    B_small = 5000
    x_small = jax.random.normal(k_x, (B_small, 1), dtype=jnp.float32)
    out_small = net_forward(x_small, w1, b1, w2, b2)
    jax.block_until_ready(out_small)
    assert out_small.shape == (B_small, 1)
    assert jnp.allclose(out_small, ref_fn(x_small), atol=1e-5, rtol=1e-5), \
        "mismatch vs reference (single-block path)"

    # Case 2: larger batch -> multi-step pipelined grid (still ~1 MiB of data).
    B_big = 2 * MAX_TILE_ROWS * TILE_COLS + 1000
    x_big = jax.random.normal(k_x, (B_big, 1), dtype=jnp.float32)
    out_big = net_forward(x_big, w1, b1, w2, b2)
    jax.block_until_ready(out_big)
    assert out_big.shape == (B_big, 1)
    assert jnp.allclose(out_big, ref_fn(x_big), atol=1e-5, rtol=1e-5), \
        "mismatch vs reference (multi-block path)"

    print("KERNEL_OK")
</pallas_src>

<mosaic_0001>
module attributes {stable_mosaic.version = 11 : i64} {
  func.func @mlp_kernel(%arg0: i32, %arg1: memref<5xf32, #tpu.memory_space<smem>>, %arg2: memref<5xf32, #tpu.memory_space<smem>>, %arg3: memref<5xf32, #tpu.memory_space<smem>>, %arg4: memref<1xf32, #tpu.memory_space<smem>>, %arg5: memref<16x512xf32, #tpu.memory_space<vmem>>, %arg6: memref<16x512xf32, #tpu.memory_space<vmem>>) attributes {dimension_semantics = [#tpu.dimension_semantics<parallel>], iteration_bounds = array<i64: 1>, scalar_prefetch = 0 : i64, scratch_operands = 0 : i64, tpu.core_type = #tpu.core_type<tc>, window_params = [{transform_indices = @transform_0, window_bounds = array<i64: 5>}, {transform_indices = @transform_1, window_bounds = array<i64: 5>}, {transform_indices = @transform_2, window_bounds = array<i64: 5>}, {transform_indices = @transform_3, window_bounds = array<i64: 1>}, {transform_indices = @transform_4, window_bounds = array<i64: 16, 512>}, {transform_indices = @transform_5, window_bounds = array<i64: 16, 512>}]} {
    %c0 = arith.constant 0 : index
    %c0_0 = arith.constant 0 : index
    %0 = vector.load %arg5[%c0, %c0_0] : memref<16x512xf32, #tpu.memory_space<vmem>>, vector<16x512xf32>
    %c0_1 = arith.constant 0 : index
    %1 = memref.load %arg1[%c0_1] : memref<5xf32, #tpu.memory_space<smem>>
    %2 = vector.broadcast %1 : f32 to vector<16x512xf32>
    %3 = arith.mulf %0, %2 : vector<16x512xf32>
    %c0_2 = arith.constant 0 : index
    %4 = memref.load %arg2[%c0_2] : memref<5xf32, #tpu.memory_space<smem>>
    %5 = vector.broadcast %4 : f32 to vector<16x512xf32>
    %6 = arith.addf %3, %5 : vector<16x512xf32>
    %cst = arith.constant 0.000000e+00 : f32
    %7 = vector.broadcast %cst : f32 to vector<16x512xf32>
    %8 = arith.maximumf %6, %7 : vector<16x512xf32>
    %c0_3 = arith.constant 0 : index
    %9 = memref.load %arg3[%c0_3] : memref<5xf32, #tpu.memory_space<smem>>
    %10 = vector.broadcast %9 : f32 to vector<16x512xf32>
    %11 = arith.mulf %8, %10 : vector<16x512xf32>
    %c0_4 = arith.constant 0 : index
    %12 = memref.load %arg4[%c0_4] : memref<1xf32, #tpu.memory_space<smem>>
    %13 = vector.broadcast %12 : f32 to vector<16x512xf32>
    %14 = arith.addf %11, %13 : vector<16x512xf32>
    %c1 = arith.constant 1 : index
    %15 = memref.load %arg1[%c1] : memref<5xf32, #tpu.memory_space<smem>>
    %16 = vector.broadcast %15 : f32 to vector<16x512xf32>
    %17 = arith.mulf %0, %16 : vector<16x512xf32>
    %c1_5 = arith.constant 1 : index
    %18 = memref.load %arg2[%c1_5] : memref<5xf32, #tpu.memory_space<smem>>
    %19 = vector.broadcast %18 : f32 to vector<16x512xf32>
    %20 = arith.addf %17, %19 : vector<16x512xf32>
    %cst_6 = arith.constant 0.000000e+00 : f32
    %21 = vector.broadcast %cst_6 : f32 to vector<16x512xf32>
    %22 = arith.maximumf %20, %21 : vector<16x512xf32>
    %c1_7 = arith.constant 1 : index
    %23 = memref.load %arg3[%c1_7] : memref<5xf32, #tpu.memory_space<smem>>
    %24 = vector.broadcast %23 : f32 to vector<16x512xf32>
    %25 = arith.mulf %22, %24 : vector<16x512xf32>
    %26 = arith.addf %14, %25 : vector<16x512xf32>
    %c2 = arith.constant 2 : index
    %27 = memref.load %arg1[%c2] : memref<5xf32, #tpu.memory_space<smem>>
    %28 = vector.broadcast %27 : f32 to vector<16x512xf32>
    %29 = arith.mulf %0, %28 : vector<16x512xf32>
    %c2_8 = arith.constant 2 : index
    %30 = memref.load %arg2[%c2_8] : memref<5xf32, #tpu.memory_space<smem>>
    %31 = vector.broadcast %30 : f32 to vector<16x512xf32>
    %32 = arith.addf %29, %31 : vector<16x512xf32>
    %cst_9 = arith.constant 0.000000e+00 : f32
    %33 = vector.broadcast %cst_9 : f32 to vector<16x512xf32>
    %34 = arith.maximumf %32, %33 : vector<16x512xf32>
    %c2_10 = arith.constant 2 : index
    %35 = memref.load %arg3[%c2_10] : memref<5xf32, #tpu.memory_space<smem>>
    %36 = vector.broadcast %35 : f32 to vector<16x512xf32>
    %37 = arith.mulf %34, %36 : vector<16x512xf32>
    %38 = arith.addf %26, %37 : vector<16x512xf32>
    %c3 = arith.constant 3 : index
    %39 = memref.load %arg1[%c3] : memref<5xf32, #tpu.memory_space<smem>>
    %40 = vector.broadcast %39 : f32 to vector<16x512xf32>
    %41 = arith.mulf %0, %40 : vector<16x512xf32>
    %c3_11 = arith.constant 3 : index
    %42 = memref.load %arg2[%c3_11] : memref<5xf32, #tpu.memory_space<smem>>
    %43 = vector.broadcast %42 : f32 to vector<16x512xf32>
    %44 = arith.addf %41, %43 : vector<16x512xf32>
    %cst_12 = arith.constant 0.000000e+00 : f32
    %45 = vector.broadcast %cst_12 : f32 to vector<16x512xf32>
    %46 = arith.maximumf %44, %45 : vector<16x512xf32>
    %c3_13 = arith.constant 3 : index
    %47 = memref.load %arg3[%c3_13] : memref<5xf32, #tpu.memory_space<smem>>
    %48 = vector.broadcast %47 : f32 to vector<16x512xf32>
    %49 = arith.mulf %46, %48 : vector<16x512xf32>
    %50 = arith.addf %38, %49 : vector<16x512xf32>
    %c4 = arith.constant 4 : index
    %51 = memref.load %arg1[%c4] : memref<5xf32, #tpu.memory_space<smem>>
    %52 = vector.broadcast %51 : f32 to vector<16x512xf32>
    %53 = arith.mulf %0, %52 : vector<16x512xf32>
    %c4_14 = arith.constant 4 : index
    %54 = memref.load %arg2[%c4_14] : memref<5xf32, #tpu.memory_space<smem>>
    %55 = vector.broadcast %54 : f32 to vector<16x512xf32>
    %56 = arith.addf %53, %55 : vector<16x512xf32>
    %cst_15 = arith.constant 0.000000e+00 : f32
    %57 = vector.broadcast %cst_15 : f32 to vector<16x512xf32>
    %58 = arith.maximumf %56, %57 : vector<16x512xf32>
    %c4_16 = arith.constant 4 : index
    %59 = memref.load %arg3[%c4_16] : memref<5xf32, #tpu.memory_space<smem>>
    %60 = vector.broadcast %59 : f32 to vector<16x512xf32>
    %61 = arith.mulf %58, %60 : vector<16x512xf32>
    %62 = arith.addf %50, %61 : vector<16x512xf32>
    %c0_17 = arith.constant 0 : index
    %c0_18 = arith.constant 0 : index
    %63 = vector.load %arg6[%c0_17, %c0_18] : memref<16x512xf32, #tpu.memory_space<vmem>>, vector<16x512xf32>
    tpu.vector_store %arg6[%c0_17, %c0_18], %62 {strides = array<i32>} : memref<16x512xf32, #tpu.memory_space<vmem>>, vector<16x512xf32>,
    return
  }
  func.func @transform_0(%arg0: i32) -> i32 {
    %c0_i32 = arith.constant 0 : i32
    %c0_i32_0 = arith.constant 0 : i32
    return %c0_i32 : i32
  }
  func.func @transform_1(%arg0: i32) -> i32 {
    %c0_i32 = arith.constant 0 : i32
    %c0_i32_0 = arith.constant 0 : i32
    return %c0_i32 : i32
  }
  func.func @transform_2(%arg0: i32) -> i32 {
    %c0_i32 = arith.constant 0 : i32
    %c0_i32_0 = arith.constant 0 : i32
    return %c0_i32 : i32
  }
  func.func @transform_3(%arg0: i32) -> i32 {
    %c0_i32 = arith.constant 0 : i32
    %c0_i32_0 = arith.constant 0 : i32
    return %c0_i32 : i32
  }
  func.func @transform_4(%arg0: i32) -> (i32, i32) {
    %c0_i32 = arith.constant 0 : i32
    %c0_i32_0 = arith.constant 0 : i32
    return %arg0, %c0_i32 : i32, i32
  }
  func.func @transform_5(%arg0: i32) -> (i32, i32) {
    %c0_i32 = arith.constant 0 : i32
    %c0_i32_0 = arith.constant 0 : i32
    return %arg0, %c0_i32 : i32, i32
  }
}

</mosaic_0001>

<llo_original>
// kernel: tpu_custom_call.1
$region0: #{tpu_custom_call.1}
  #allocation0 [shape = 'u32[]', space=smem, size = 0x4, offset = 0x4, fixed_abs, tag = 'smem constant byte address 0x4 - core index']
  #allocation1 [shape = 'u32[72,128]{1,0:T(1,128)}', space=vmem, size = 0x9000, scoped, tag = 'internal scratch']
  #allocation2 [shape = 'f32[1]{0:T(128)S(6)}', space=smem, size = 0x200, scoped, tag = 'scoped memory for tpu_custom_call.1']
  %s0 = inlined_call_operand.vmem [shape: f32[5], index: 0, kind: input, shape index: {}]
  %s1 = inlined_call_operand.vmem [shape: f32[5], index: 1, kind: input, shape index: {}]
  %s2 = inlined_call_operand.vmem [shape: f32[5], index: 2, kind: input, shape index: {}]
  %s3 = inlined_call_operand.<no memory space> [shape: f32[1], index: 3, kind: input, shape index: {}]
  %s4 = inlined_call_operand.hbm [shape: f32[16,512], index: 4, kind: input, shape index: {}]
  %s5 = inlined_call_operand.hbm [shape: f32[16,512], index: 5, kind: output, shape index: {}]
  %s6 = sld [smem:[#allocation0]]
  $region46: #{tpu_custom_call.1} parent=0
    _
  %s8 = ssub.s32 1, %s6
  %s9 = scalar_select 0, %s8, %s6
  %10 = sst [smem:[#allocation2]] %s3
  $region1: #{tpu_custom_call.1} parent=0
    #allocation3 [shape = 'u8[512]{0}', space=smem, size = 0x200, scoped, tag = 'input window, operand 0, single buffered']
    #allocation4 [shape = 's32[1]{0}', space=sflag, size = 0x4, scoped, tag = 'scoped memory for tpu_custom_call.1']
    #allocation5 [shape = 's32[1]{0}', space=sflag, size = 0x4, scoped, tag = 'scoped memory for tpu_custom_call.1']
    #allocation6 [shape = 's32[1]{0}', space=sflag, size = 0x4, scoped, tag = 'scoped memory for tpu_custom_call.1']
    #allocation7 [shape = 'u8[512]{0}', space=smem, size = 0x200, scoped, tag = 'input window, operand 1, single buffered']
    #allocation8 [shape = 's32[1]{0}', space=sflag, size = 0x4, scoped, tag = 'scoped memory for tpu_custom_call.1']
    #allocation9 [shape = 'u8[512]{0}', space=smem, size = 0x200, scoped, tag = 'input window, operand 2, single buffered']
    #allocation10 [shape = 'u8[32768]{0}', space=vmem, size = 0x8000, scoped, tag = 'input window, operand 4, single buffered']
    #allocation11 [shape = 'u8[32768]{0}', space=vmem, size = 0x8000, scoped, tag = 'output window, operand 0, single buffered']
    %11 = vsyncpa [#allocation6], 0
    %12 = vsyncpa [#allocation8], 0
    %13 = vsyncpa [#allocation4], 0
    %14 = vsyncpa [#allocation5], 0
    // Predicated region
    $region2: #{tpu_custom_call.1} parent=1 // pred_check
      _
    $region3: #{tpu_custom_call.1} parent=1 // pred_check_branch
      %16 = sbr.rel (0) target = $region5
    $region4: #{tpu_custom_call.1} parent=1 // pred_region
      %18 = vsyncadd [#allocation6], 0
      %s20 = sshll.u32 %s0, 4
      %s21 = int_to_ptr.vmem [resolvable:$true] %s20
      %23 = dma.vmem_to_smem %s21, 16, [#allocation3], [#allocation6]
    $region5: #{tpu_custom_call.1} parent=1 // pred_fallthru
      _
    // Predicated region
    $region6: #{tpu_custom_call.1} parent=1 // pred_check
      _
    $region7: #{tpu_custom_call.1} parent=1 // pred_check_branch
      %25 = sbr.rel (0) target = $region9
    $region8: #{tpu_custom_call.1} parent=1 // pred_region
      %27 = vsyncadd [#allocation8], 0
      %s29 = sshll.u32 %s1, 4
      %s30 = int_to_ptr.vmem [resolvable:$true] %s29
      %32 = dma.vmem_to_smem %s30, 16, [#allocation7], [#allocation8]
    $region9: #{tpu_custom_call.1} parent=1 // pred_fallthru
      _
    // Predicated region
    $region10: #{tpu_custom_call.1} parent=1 // pred_check
      _
    $region11: #{tpu_custom_call.1} parent=1 // pred_check_branch
      %34 = sbr.rel (0) target = $region13
    $region12: #{tpu_custom_call.1} parent=1 // pred_region
      %36 = vsyncadd [#allocation8], 0
      %s38 = sshll.u32 %s2, 4
      %s39 = int_to_ptr.vmem [resolvable:$true] %s38
      %41 = dma.vmem_to_smem %s39, 16, [#allocation9], [#allocation8]
    $region13: #{tpu_custom_call.1} parent=1 // pred_fallthru
      _
    // Predicated region
    $region14: #{tpu_custom_call.1} parent=1 // pred_check
      _
    $region15: #{tpu_custom_call.1} parent=1 // pred_check_branch
      %43 = sbr.rel (0) target = $region17
    $region16: #{tpu_custom_call.1} parent=1 // pred_region
      _
    $region17: #{tpu_custom_call.1} parent=1 // pred_fallthru
      _
    // Predicated region
    $region18: #{tpu_custom_call.1} parent=1 // pred_check
      _
    $region19: #{tpu_custom_call.1} parent=1 // pred_check_branch
      %45 = sbr.rel (0) target = $region21
    $region20: #{tpu_custom_call.1} parent=1 // pred_region
      %47 = vsyncadd [#allocation4], 0
      %s48 = sshll.u32 %s4, 4
      %s49 = int_to_ptr.hbm [resolvable:$true] %s48
      %s50 = sshll.u32 [#allocation10], 4
      %s51 = int_to_ptr.vmem [resolvable:$true] %s50
      %56 = dma.hbm_to_vmem [thread:$0]  %s49, 1024, %s51, [#allocation4], 512, 512, 32
    $region21: #{tpu_custom_call.1} parent=1 // pred_fallthru
      _
    // Predicated region
    $region22: #{tpu_custom_call.1} parent=1 // pred_check
      _
    $region23: #{tpu_custom_call.1} parent=1 // pred_check_branch
      %58 = sbr.rel (0) target = $region25
    $region24: #{tpu_custom_call.1} parent=1 // pred_region
      %60 = dma.done [#allocation6], 16
    $region25: #{tpu_custom_call.1} parent=1 // pred_fallthru
      _
    // Predicated region
    $region26: #{tpu_custom_call.1} parent=1 // pred_check
      _
    $region27: #{tpu_custom_call.1} parent=1 // pred_check_branch
      %62 = sbr.rel (0) target = $region29
    $region28: #{tpu_custom_call.1} parent=1 // pred_region
      %64 = dma.done [#allocation8], 16
    $region29: #{tpu_custom_call.1} parent=1 // pred_fallthru
      _
    // Predicated region
    $region30: #{tpu_custom_call.1} parent=1 // pred_check
      _
    $region31: #{tpu_custom_call.1} parent=1 // pred_check_branch
      %66 = sbr.rel (0) target = $region33
    $region32: #{tpu_custom_call.1} parent=1 // pred_region
      %68 = dma.done [#allocation8], 16
    $region33: #{tpu_custom_call.1} parent=1 // pred_fallthru
      _
    // Predicated region
    $region34: #{tpu_custom_call.1} parent=1 // pred_check
      _
    $region35: #{tpu_custom_call.1} parent=1 // pred_check_branch
      %70 = sbr.rel (0) target = $region37
    $region36: #{tpu_custom_call.1} parent=1 // pred_region
      %72 = dma.done [#allocation4], 1024
    $region37: #{tpu_custom_call.1} parent=1 // pred_fallthru
      _
    %73 = sfence
    %v74 = vld [vmem:[#allocation10] sm:$0xff]
    %v75 = vld [vmem:[#allocation10 + $0x8] sm:$0xff]
    %v76 = vld [vmem:[#allocation10 + $0x10] sm:$0xff]
    %v77 = vld [vmem:[#allocation10 + $0x18] sm:$0xff]
    %v78 = vld [vmem:[#allocation10 + $0x20] sm:$0xff]
    %v79 = vld [vmem:[#allocation10 + $0x28] sm:$0xff]
    %v80 = vld [vmem:[#allocation10 + $0x30] sm:$0xff]
    %v81 = vld [vmem:[#allocation10 + $0x38] sm:$0xff]
    %s82 = sld [smem:[#allocation3]]
    %v83 = vstv %s82
    %v84 = vmul.f32 %v74, %v83
    %v85 = vmul.f32 %v75, %v83
    %v86 = vmul.f32 %v76, %v83
    %v87 = vmul.f32 %v77, %v83
    %v88 = vmul.f32 %v78, %v83
    %v89 = vmul.f32 %v79, %v83
    %v90 = vmul.f32 %v80, %v83
    %v91 = vmul.f32 %v81, %v83
    %s92 = sld [smem:[#allocation7]]
    %v93 = vstv %s92
    %v94 = vadd.f32 %v84, %v93
    %v95 = vadd.f32 %v85, %v93
    %v96 = vadd.f32 %v86, %v93
    %v97 = vadd.f32 %v87, %v93
    %v98 = vadd.f32 %v88, %v93
    %v99 = vadd.f32 %v89, %v93
    %v100 = vadd.f32 %v90, %v93
    %v101 = vadd.f32 %v91, %v93
    %v102 = vmax.f32 %v94, 0.0
    %v103 = vmax.f32 %v95, 0.0
    %v104 = vmax.f32 %v96, 0.0
    %v105 = vmax.f32 %v97, 0.0
    %v106 = vmax.f32 %v98, 0.0
    %v107 = vmax.f32 %v99, 0.0
    %v108 = vmax.f32 %v100, 0.0
    %v109 = vmax.f32 %v101, 0.0
    %s110 = sld [smem:[#allocation9]]
    %v111 = vstv %s110
    %v112 = vmul.f32 %v102, %v111
    %v113 = vmul.f32 %v103, %v111
    %v114 = vmul.f32 %v104, %v111
    %v115 = vmul.f32 %v105, %v111
    %v116 = vmul.f32 %v106, %v111
    %v117 = vmul.f32 %v107, %v111
    %v118 = vmul.f32 %v108, %v111
    %v119 = vmul.f32 %v109, %v111
    %s120 = sld [smem:[#allocation2]]
    %v121 = vstv %s120
    %v122 = vadd.f32 %v112, %v121
    %v123 = vadd.f32 %v113, %v121
    %v124 = vadd.f32 %v114, %v121
    %v125 = vadd.f32 %v115, %v121
    %v126 = vadd.f32 %v116, %v121
    %v127 = vadd.f32 %v117, %v121
    %v128 = vadd.f32 %v118, %v121
    %v129 = vadd.f32 %v119, %v121
    %s130 = sld [smem:[#allocation3 + $0x1]]
    %v131 = vstv %s130
    %v132 = vmul.f32 %v74, %v131
    %v133 = vmul.f32 %v75, %v131
    %v134 = vmul.f32 %v76, %v131
    %v135 = vmul.f32 %v77, %v131
    %v136 = vmul.f32 %v78, %v131
    %v137 = vmul.f32 %v79, %v131
    %v138 = vmul.f32 %v80, %v131
    %v139 = vmul.f32 %v81, %v131
    %s140 = sld [smem:[#allocation7 + $0x1]]
    %v141 = vstv %s140
    %v142 = vadd.f32 %v132, %v141
    %v143 = vadd.f32 %v133, %v141
    %v144 = vadd.f32 %v134, %v141
    %v145 = vadd.f32 %v135, %v141
    %v146 = vadd.f32 %v136, %v141
    %v147 = vadd.f32 %v137, %v141
    %v148 = vadd.f32 %v138, %v141
    %v149 = vadd.f32 %v139, %v141
    %v150 = vmax.f32 %v142, 0.0
    %v151 = vmax.f32 %v143, 0.0
    %v152 = vmax.f32 %v144, 0.0
    %v153 = vmax.f32 %v145, 0.0
    %v154 = vmax.f32 %v146, 0.0
    %v155 = vmax.f32 %v147, 0.0
    %v156 = vmax.f32 %v148, 0.0
    %v157 = vmax.f32 %v149, 0.0
    %s158 = sld [smem:[#allocation9 + $0x1]]
    %v159 = vstv %s158
    %v160 = vmul.f32 %v150, %v159
    %v161 = vmul.f32 %v151, %v159
    %v162 = vmul.f32 %v152, %v159
    %v163 = vmul.f32 %v153, %v159
    %v164 = vmul.f32 %v154, %v159
    %v165 = vmul.f32 %v155, %v159
    %v166 = vmul.f32 %v156, %v159
    %v167 = vmul.f32 %v157, %v159
    %v168 = vadd.f32 %v122, %v160
    %v169 = vadd.f32 %v123, %v161
    %v170 = vadd.f32 %v124, %v162
    %v171 = vadd.f32 %v125, %v163
    %v172 = vadd.f32 %v126, %v164
    %v173 = vadd.f32 %v127, %v165
    %v174 = vadd.f32 %v128, %v166
    %v175 = vadd.f32 %v129, %v167
    %s176 = sld [smem:[#allocation3 + $0x2]]
    %v177 = vstv %s176
    %v178 = vmul.f32 %v74, %v177
    %v179 = vmul.f32 %v75, %v177
    %v180 = vmul.f32 %v76, %v177
    %v181 = vmul.f32 %v77, %v177
    %v182 = vmul.f32 %v78, %v177
    %v183 = vmul.f32 %v79, %v177
    %v184 = vmul.f32 %v80, %v177
    %v185 = vmul.f32 %v81, %v177
    %s186 = sld [smem:[#allocation7 + $0x2]]
    %v187 = vstv %s186
    %v188 = vadd.f32 %v178, %v187
    %v189 = vadd.f32 %v179, %v187
    %v190 = vadd.f32 %v180, %v187
    %v191 = vadd.f32 %v181, %v187
    %v192 = vadd.f32 %v182, %v187
    %v193 = vadd.f32 %v183, %v187
    %v194 = vadd.f32 %v184, %v187
    %v195 = vadd.f32 %v185, %v187
    %v196 = vmax.f32 %v188, 0.0
    %v197 = vmax.f32 %v189, 0.0
    %v198 = vmax.f32 %v190, 0.0
    %v199 = vmax.f32 %v191, 0.0
    %v200 = vmax.f32 %v192, 0.0
    %v201 = vmax.f32 %v193, 0.0
    %v202 = vmax.f32 %v194, 0.0
    %v203 = vmax.f32 %v195, 0.0
    %s204 = sld [smem:[#allocation9 + $0x2]]
    %v205 = vstv %s204
    %v206 = vmul.f32 %v196, %v205
    %v207 = vmul.f32 %v197, %v205
    %v208 = vmul.f32 %v198, %v205
    %v209 = vmul.f32 %v199, %v205
    %v210 = vmul.f32 %v200, %v205
    %v211 = vmul.f32 %v201, %v205
    %v212 = vmul.f32 %v202, %v205
    %v213 = vmul.f32 %v203, %v205
    %v214 = vadd.f32 %v168, %v206
    %v215 = vadd.f32 %v169, %v207
    %v216 = vadd.f32 %v170, %v208
    %v217 = vadd.f32 %v171, %v209
    %v218 = vadd.f32 %v172, %v210
    %v219 = vadd.f32 %v173, %v211
    %v220 = vadd.f32 %v174, %v212
    %v221 = vadd.f32 %v175, %v213
    %s222 = sld [smem:[#allocation3 + $0x3]]
    %v223 = vstv %s222
    %v224 = vmul.f32 %v74, %v223
    %v225 = vmul.f32 %v75, %v223
    %v226 = vmul.f32 %v76, %v223
    %v227 = vmul.f32 %v77, %v223
    %v228 = vmul.f32 %v78, %v223
    %v229 = vmul.f32 %v79, %v223
    %v230 = vmul.f32 %v80, %v223
    %v231 = vmul.f32 %v81, %v223
    %s232 = sld [smem:[#allocation7 + $0x3]]
    %v233 = vstv %s232
    %v234 = vadd.f32 %v224, %v233
    %v235 = vadd.f32 %v225, %v233
    %v236 = vadd.f32 %v226, %v233
    %v237 = vadd.f32 %v227, %v233
    %v238 = vadd.f32 %v228, %v233
    %v239 = vadd.f32 %v229, %v233
    %v240 = vadd.f32 %v230, %v233
    %v241 = vadd.f32 %v231, %v233
    %v242 = vmax.f32 %v234, 0.0
    %v243 = vmax.f32 %v235, 0.0
    %v244 = vmax.f32 %v236, 0.0
    %v245 = vmax.f32 %v237, 0.0
    %v246 = vmax.f32 %v238, 0.0
    %v247 = vmax.f32 %v239, 0.0
    %v248 = vmax.f32 %v240, 0.0
    %v249 = vmax.f32 %v241, 0.0
    %s250 = sld [smem:[#allocation9 + $0x3]]
    %v251 = vstv %s250
    %v252 = vmul.f32 %v242, %v251
    %v253 = vmul.f32 %v243, %v251
    %v254 = vmul.f32 %v244, %v251
    %v255 = vmul.f32 %v245, %v251
    %v256 = vmul.f32 %v246, %v251
    %v257 = vmul.f32 %v247, %v251
    %v258 = vmul.f32 %v248, %v251
    %v259 = vmul.f32 %v249, %v251
    %v260 = vadd.f32 %v214, %v252
    %v261 = vadd.f32 %v215, %v253
    %v262 = vadd.f32 %v216, %v254
    %v263 = vadd.f32 %v217, %v255
    %v264 = vadd.f32 %v218, %v256
    %v265 = vadd.f32 %v219, %v257
    %v266 = vadd.f32 %v220, %v258
    %v267 = vadd.f32 %v221, %v259
    %s268 = sld [smem:[#allocation3 + $0x4]]
    %v269 = vstv %s268
    %v270 = vmul.f32 %v74, %v269
    %v271 = vmul.f32 %v75, %v269
    %v272 = vmul.f32 %v76, %v269
    %v273 = vmul.f32 %v77, %v269
    %v274 = vmul.f32 %v78, %v269
    %v275 = vmul.f32 %v79, %v269
    %v276 = vmul.f32 %v80, %v269
    %v277 = vmul.f32 %v81, %v269
    %s278 = sld [smem:[#allocation7 + $0x4]]
    %v279 = vstv %s278
    %v280 = vadd.f32 %v270, %v279
    %v281 = vadd.f32 %v271, %v279
    %v282 = vadd.f32 %v272, %v279
    %v283 = vadd.f32 %v273, %v279
    %v284 = vadd.f32 %v274, %v279
    %v285 = vadd.f32 %v275, %v279
    %v286 = vadd.f32 %v276, %v279
    %v287 = vadd.f32 %v277, %v279
    %v288 = vmax.f32 %v280, 0.0
    %v289 = vmax.f32 %v281, 0.0
    %v290 = vmax.f32 %v282, 0.0
    %v291 = vmax.f32 %v283, 0.0
    %v292 = vmax.f32 %v284, 0.0
    %v293 = vmax.f32 %v285, 0.0
    %v294 = vmax.f32 %v286, 0.0
    %v295 = vmax.f32 %v287, 0.0
    %s296 = sld [smem:[#allocation9 + $0x4]]
    %v297 = vstv %s296
    %v298 = vmul.f32 %v288, %v297
    %v299 = vmul.f32 %v289, %v297
    %v300 = vmul.f32 %v290, %v297
    %v301 = vmul.f32 %v291, %v297
    %v302 = vmul.f32 %v292, %v297
    %v303 = vmul.f32 %v293, %v297
    %v304 = vmul.f32 %v294, %v297
    %v305 = vmul.f32 %v295, %v297
    %v306 = vadd.f32 %v260, %v298
    %v307 = vadd.f32 %v261, %v299
    %v308 = vadd.f32 %v262, %v300
    %v309 = vadd.f32 %v263, %v301
    %v310 = vadd.f32 %v264, %v302
    %v311 = vadd.f32 %v265, %v303
    %v312 = vadd.f32 %v266, %v304
    %v313 = vadd.f32 %v267, %v305
    %314 = vst [vmem:[#allocation11] sm:$0xff] %v306
    %315 = vst [vmem:[#allocation11 + $0x8] sm:$0xff] %v307
    %316 = vst [vmem:[#allocation11 + $0x10] sm:$0xff] %v308
    %317 = vst [vmem:[#allocation11 + $0x18] sm:$0xff] %v309
    %318 = vst [vmem:[#allocation11 + $0x20] sm:$0xff] %v310
    %319 = vst [vmem:[#allocation11 + $0x28] sm:$0xff] %v311
    %320 = vst [vmem:[#allocation11 + $0x30] sm:$0xff] %v312
    %321 = vst [vmem:[#allocation11 + $0x38] sm:$0xff] %v313
    // Predicated region
    $region38: #{tpu_custom_call.1} parent=1 // pred_check
      _
    $region39: #{tpu_custom_call.1} parent=1 // pred_check_branch
      %323 = sbr.rel (0) target = $region41
    $region40: #{tpu_custom_call.1} parent=1 // pred_region
      %325 = vsyncadd [#allocation5], 0
      %s326 = sshll.u32 [#allocation11], 4
      %s327 = int_to_ptr.vmem [resolvable:$true] %s326
      %s328 = sshll.u32 %s5, 4
      %s329 = int_to_ptr.hbm [resolvable:$true] %s328
      %334 = dma.vmem_to_hbm [thread:$0]  %s327, 1024, %s329, [#allocation5], 512, 512, 32
    $region41: #{tpu_custom_call.1} parent=1 // pred_fallthru
      _
    // Predicated region
    $region42: #{tpu_custom_call.1} parent=1 // pred_check
      _
    $region43: #{tpu_custom_call.1} parent=1 // pred_check_branch
      %336 = sbr.rel (0) target = $region45
    $region44: #{tpu_custom_call.1} parent=1 // pred_region
      %338 = dma.done [#allocation5], 1024
    $region45: #{tpu_custom_call.1} parent=1 // pred_fallthru
      _
    %339 = vsyncpa [#allocation4], 1
    %340 = vsyncpa [#allocation5], 1
    %341 = vsyncpa [#allocation6], 1
    %342 = vsyncpa [#allocation8], 1

</llo_original>
